<compile_context>
chip_gen: v7x
topology: tpu7x:2x2x1
jax: 0.10.0
libtpu: 0.0.40
codegen_flags: <defaults>
</compile_context>

<pallas_src>
import functools

import jax
import jax.numpy as jnp
from jax.experimental import pallas as pl
from jax.experimental.pallas import tpu as pltpu

# TODO(synk): the custom PANConv body is not part of the provided spec; this
# implements torch_geometric PANConv semantics (MET matrix over A^0..A^F with
# learnable per-layer weights, symmetric degree norm, then Linear) with F=2.
FILTER_SIZE = 2


def _gelu_tanh(x):
    # TODO(synk): nn.GELU() default is the exact erf form; the tanh
    # approximation is used for guaranteed Pallas/Mosaic lowering (|diff|~1e-3).
    c = 0.7978845608028654  # sqrt(2/pi)
    return 0.5 * x * (1.0 + jnp.tanh(c * (x + 0.044715 * x * x * x)))


# ------------------------------ Pallas kernel ------------------------------ #
def pannet_kernel(m_ref, x0_ref, w_ref, b_ref, o_ref, *, num_layers):
    """One grid step == one PANConv layer.

    o_ref has a constant block index -> it is the resident node-feature state
    (f32, VMEM) across the whole layer chain; m_ref streams the per-layer bf16
    MET matrix (double-buffered by the auto-pipeline).
    """
    l = pl.program_id(0)

    @pl.when(l == 0)
    def _():
        o_ref[...] = x0_ref[...]                        # load initial features

    x = o_ref[...]                                      # (N, C) f32 state
    # aggregation: M_l @ x   (bf16 MXU operands, f32 accumulation)
    agg = jnp.dot(m_ref[0], x.astype(jnp.bfloat16),
                  preferred_element_type=jnp.float32)   # (N, C) f32
    # linear: agg @ W_l + b_l   (tiny, kept in f32)
    out = jnp.dot(agg, w_ref[0],
                  preferred_element_type=jnp.float32) + b_ref[0]

    @pl.when(l < num_layers - 1)
    def _():
        o_ref[...] = _gelu_tanh(out)                    # GELU between layers

    @pl.when(l == num_layers - 1)
    def _():
        o_ref[...] = out                                # no activation on last


def pannet_forward(m_stack_bf16, x, w_stack, b_stack, planes):
    L, N, _ = m_stack_bf16.shape
    C = w_stack.shape[-1]                               # padded channel width
    x0 = jnp.zeros((N, C), jnp.float32).at[:, :planes[0]].set(x)

    out_pad = pl.pallas_call(
        functools.partial(pannet_kernel, num_layers=L),
        out_shape=jax.ShapeDtypeStruct((N, C), jnp.float32),
        grid_spec=pltpu.PrefetchScalarGridSpec(
            num_scalar_prefetch=0,
            grid=(L,),
            in_specs=[
                pl.BlockSpec((1, N, N), lambda l: (l, 0, 0)),  # M_l (streamed)
                pl.BlockSpec((N, C), lambda l: (0, 0)),        # x0 (resident)
                pl.BlockSpec((1, C, C), lambda l: (l, 0, 0)),  # W_l
                pl.BlockSpec((1, 1, C), lambda l: (l, 0, 0)),  # b_l
            ],
            out_specs=pl.BlockSpec((N, C), lambda l: (0, 0)),  # resident state
        ),
        compiler_params=pltpu.CompilerParams(
            dimension_semantics=("arbitrary",),   # layers are truly sequential
            vmem_limit_bytes=32 * 1024 * 1024,
        ),
    )(m_stack_bf16, x0, w_stack, b_stack)
    return out_pad[:, :planes[-1]]


# --------------------------- graph preprocessing --------------------------- #
def build_met_matrices(edge_index, num_nodes, met_weights):
    """Dense per-layer MET matrices M_l (torch_geometric PANConv)."""
    src, tgt = edge_index[0], edge_index[1]
    A = jnp.zeros((num_nodes, num_nodes), jnp.float32).at[tgt, src].set(1.0)
    filter_size = met_weights.shape[1] - 1
    powers = [jnp.eye(num_nodes, dtype=jnp.float32)]
    for _ in range(filter_size):
        powers.append(jnp.dot(powers[-1], A,
                              precision=jax.lax.Precision.HIGHEST))
    P = jnp.stack(powers)                                 # (F+1, N, N)
    S = jnp.einsum('lf,fij->lij', met_weights, P)         # (L, N, N)
    deg = S.sum(axis=2)                                   # (L, N)
    dinv = jnp.where(deg > 0, 1.0 / jnp.sqrt(deg), 0.0)
    return dinv[:, :, None] * S * dinv[:, None, :]        # (L, N, N) f32


# -------------------------------- parameters ------------------------------- #
def init_params(planes, key):
    params = []
    for i in range(len(planes) - 1):
        cin, cout = planes[i], planes[i + 1]
        key, kw, kb = jax.random.split(key, 3)
        s = 1.0 / (cin ** 0.5)
        W = jax.random.uniform(kw, (cin, cout), jnp.float32, -s, s)
        b = jax.random.uniform(kb, (cout,), jnp.float32, -s, s)
        params.append((W, b))
    return params


def stack_params(params, cmax):
    L = len(params)
    Ws = jnp.zeros((L, cmax, cmax), jnp.float32)
    Bs = jnp.zeros((L, 1, cmax), jnp.float32)
    for l, (W, b) in enumerate(params):
        cin, cout = W.shape
        Ws = Ws.at[l, :cin, :cout].set(W)
        Bs = Bs.at[l, 0, :cout].set(b)
    return Ws, Bs


# ----------------------------- pure-JAX reference -------------------------- #
def pannet_ref(x, m_stack_bf16, params):
    L = len(params)
    for l, (W, b) in enumerate(params):
        agg = jnp.dot(m_stack_bf16[l], x.astype(jnp.bfloat16),
                      preferred_element_type=jnp.float32)
        out = jnp.dot(agg, W, precision=jax.lax.Precision.HIGHEST) + b
        x = out if l == L - 1 else _gelu_tanh(out)
    return x


# ------------------------------------ main ---------------------------------- #
if __name__ == "__main__":
    planes = [4, 16, 32, 16, 8]
    N, E = 64, 256

    root = jax.random.PRNGKey(0)
    kx, ke, kp, km = jax.random.split(root, 4)

    x = jax.random.normal(kx, (N, planes[0]), jnp.float32)
    edge_index = jax.random.randint(ke, (2, E), 0, N, dtype=jnp.int32)

    params = init_params(planes, kp)
    L = len(params)
    met_w = 0.5 + 0.25 * jax.random.uniform(km, (L, FILTER_SIZE + 1),
                                            jnp.float32)

    m_stack = build_met_matrices(edge_index, N, met_w)      # (L, N, N) f32
    m_stack_bf16 = m_stack.astype(jnp.bfloat16)             # halve HBM bytes

    cmax = ((max(planes) + 127) // 128) * 128               # lane-dense pad
    w_stack, b_stack = stack_params(params, cmax)

    out = jax.block_until_ready(
        pannet_forward(m_stack_bf16, x, w_stack, b_stack, planes))
    ref = jax.block_until_ready(pannet_ref(x, m_stack_bf16, params))

    assert out.shape == (N, planes[-1]), out.shape
    max_err = float(jnp.max(jnp.abs(out - ref)))
    assert jnp.allclose(out, ref, atol=2e-2, rtol=2e-2), max_err
    print("KERNEL_OK")
</pallas_src>

<mosaic_0001>
module attributes {stable_mosaic.version = 11 : i64} {
  func.func @pannet_kernel(%arg0: i32, %arg1: memref<1x64x64xbf16, #tpu.memory_space<vmem>>, %arg2: memref<64x128xf32, #tpu.memory_space<vmem>>, %arg3: memref<1x128x128xf32, #tpu.memory_space<vmem>>, %arg4: memref<1x1x128xf32, #tpu.memory_space<vmem>>, %arg5: memref<64x128xf32, #tpu.memory_space<vmem>>) attributes {dimension_semantics = [#tpu.dimension_semantics<arbitrary>], iteration_bounds = array<i64: 4>, scalar_prefetch = 0 : i64, scratch_operands = 0 : i64, tpu.core_type = #tpu.core_type<tc>, window_params = [{transform_indices = @transform_0, window_bounds = array<i64: 1, 64, 64>}, {pipeline_mode = #tpu.pipeline_mode<synchronous>, transform_indices = @transform_1, window_bounds = array<i64: 64, 128>}, {transform_indices = @transform_2, window_bounds = array<i64: 1, 128, 128>}, {transform_indices = @transform_3, window_bounds = array<i64: 1, 1, 128>}, {pipeline_mode = #tpu.pipeline_mode<synchronous>, transform_indices = @transform_4, window_bounds = array<i64: 64, 128>}]} {
    %c0_i32 = arith.constant 0 : i32
    %0 = arith.cmpi eq, %arg0, %c0_i32 : i32
    %1 = arith.extui %0 : i1 to i32
    %c0_i32_0 = arith.constant 0 : i32
    %2 = arith.cmpi ne, %1, %c0_i32_0 : i32
    scf.if %2 {
      %c0_15 = arith.constant 0 : index
      %c0_16 = arith.constant 0 : index
      %21 = vector.load %arg2[%c0_15, %c0_16] : memref<64x128xf32, #tpu.memory_space<vmem>>, vector<64x128xf32>
      %c0_17 = arith.constant 0 : index
      %c0_18 = arith.constant 0 : index
      %22 = vector.load %arg5[%c0_17, %c0_18] : memref<64x128xf32, #tpu.memory_space<vmem>>, vector<64x128xf32>
      tpu.vector_store %arg5[%c0_17, %c0_18], %21 {strides = array<i32>} : memref<64x128xf32, #tpu.memory_space<vmem>>, vector<64x128xf32>,
    } else {
    }
    %c0 = arith.constant 0 : index
    %c0_1 = arith.constant 0 : index
    %3 = vector.load %arg5[%c0, %c0_1] : memref<64x128xf32, #tpu.memory_space<vmem>>, vector<64x128xf32>
    %c0_2 = arith.constant 0 : index
    %c0_3 = arith.constant 0 : index
    %c0_4 = arith.constant 0 : index
    %4 = vector.load %arg1[%c0_2, %c0_3, %c0_4] : memref<1x64x64xbf16, #tpu.memory_space<vmem>>, vector<1x64x64xbf16>
    %5 = vector.shape_cast %4 : vector<1x64x64xbf16> to vector<64x64xbf16>
    %6 = arith.truncf %3 : vector<64x128xf32> to vector<64x128xbf16>
    %cst = arith.constant dense<0.000000e+00> : vector<64x128xf32>
    %7 = tpu.matmul %5, %6, %cst {dimension_numbers = #tpu.dot_dimension_numbers<[1], [0], [0], [1], [0, 0, 1, 1], [], []>} : vector<64x64xbf16>, vector<64x128xbf16>, vector<64x128xf32> -> vector<64x128xf32>
    %c0_5 = arith.constant 0 : index
    %c0_6 = arith.constant 0 : index
    %c0_7 = arith.constant 0 : index
    %8 = vector.load %arg3[%c0_5, %c0_6, %c0_7] : memref<1x128x128xf32, #tpu.memory_space<vmem>>, vector<1x128x128xf32>
    %9 = vector.shape_cast %8 : vector<1x128x128xf32> to vector<128x128xf32>
    %cst_8 = arith.constant dense<0.000000e+00> : vector<64x128xf32>
    %10 = tpu.matmul %7, %9, %cst_8 {dimension_numbers = #tpu.dot_dimension_numbers<[1], [0], [0], [1], [0, 0, 1, 1], [], []>} : vector<64x128xf32>, vector<128x128xf32>, vector<64x128xf32> -> vector<64x128xf32>
    %c0_9 = arith.constant 0 : index
    %c0_10 = arith.constant 0 : index
    %c0_11 = arith.constant 0 : index
    %11 = vector.load %arg4[%c0_9, %c0_10, %c0_11] : memref<1x1x128xf32, #tpu.memory_space<vmem>>, vector<1x1x128xf32>
    %12 = vector.shape_cast %11 : vector<1x1x128xf32> to vector<1x128xf32>
    %13 = vector.broadcast %12 : vector<1x128xf32> to vector<64x128xf32>
    %14 = arith.addf %10, %13 : vector<64x128xf32>
    %c3_i32 = arith.constant 3 : i32
    %15 = arith.cmpi slt, %arg0, %c3_i32 : i32
    %16 = arith.extui %15 : i1 to i32
    %c0_i32_12 = arith.constant 0 : i32
    %17 = arith.cmpi ne, %16, %c0_i32_12 : i32
    scf.if %17 {
      %cst_15 = arith.constant 5.000000e-01 : f32
      %21 = vector.broadcast %cst_15 : f32 to vector<64x128xf32>
      %22 = arith.mulf %21, %14 : vector<64x128xf32>
      %cst_16 = arith.constant 4.471500e-02 : f32
      %23 = vector.broadcast %cst_16 : f32 to vector<64x128xf32>
      %24 = arith.mulf %23, %14 : vector<64x128xf32>
      %25 = arith.mulf %24, %14 : vector<64x128xf32>
      %26 = arith.mulf %25, %14 : vector<64x128xf32>
      %27 = arith.addf %14, %26 : vector<64x128xf32>
      %cst_17 = arith.constant 0.797884583 : f32
      %28 = vector.broadcast %cst_17 : f32 to vector<64x128xf32>
      %29 = arith.mulf %28, %27 : vector<64x128xf32>
      %30 = math.tanh %29 : vector<64x128xf32>
      %cst_18 = arith.constant 1.000000e+00 : f32
      %31 = vector.broadcast %cst_18 : f32 to vector<64x128xf32>
      %32 = arith.addf %31, %30 : vector<64x128xf32>
      %33 = arith.mulf %22, %32 : vector<64x128xf32>
      %c0_19 = arith.constant 0 : index
      %c0_20 = arith.constant 0 : index
      %34 = vector.load %arg5[%c0_19, %c0_20] : memref<64x128xf32, #tpu.memory_space<vmem>>, vector<64x128xf32>
      tpu.vector_store %arg5[%c0_19, %c0_20], %33 {strides = array<i32>} : memref<64x128xf32, #tpu.memory_space<vmem>>, vector<64x128xf32>,
    } else {
    }
    %c3_i32_13 = arith.constant 3 : i32
    %18 = arith.cmpi eq, %arg0, %c3_i32_13 : i32
    %19 = arith.extui %18 : i1 to i32
    %c0_i32_14 = arith.constant 0 : i32
    %20 = arith.cmpi ne, %19, %c0_i32_14 : i32
    scf.if %20 {
      %c0_15 = arith.constant 0 : index
      %c0_16 = arith.constant 0 : index
      %21 = vector.load %arg5[%c0_15, %c0_16] : memref<64x128xf32, #tpu.memory_space<vmem>>, vector<64x128xf32>
      tpu.vector_store %arg5[%c0_15, %c0_16], %14 {strides = array<i32>} : memref<64x128xf32, #tpu.memory_space<vmem>>, vector<64x128xf32>,
    } else {
    }
    return
  }
  func.func @transform_0(%arg0: i32) -> (i32, i32, i32) {
    %c0_i32 = arith.constant 0 : i32
    %c0_i32_0 = arith.constant 0 : i32
    %c0_i32_1 = arith.constant 0 : i32
    return %arg0, %c0_i32, %c0_i32_0 : i32, i32, i32
  }
  func.func @transform_1(%arg0: i32) -> (i32, i32) {
    %c0_i32 = arith.constant 0 : i32
    %c0_i32_0 = arith.constant 0 : i32
    %c0_i32_1 = arith.constant 0 : i32
    return %c0_i32, %c0_i32_0 : i32, i32
  }
  func.func @transform_2(%arg0: i32) -> (i32, i32, i32) {
    %c0_i32 = arith.constant 0 : i32
    %c0_i32_0 = arith.constant 0 : i32
    %c0_i32_1 = arith.constant 0 : i32
    return %arg0, %c0_i32, %c0_i32_0 : i32, i32, i32
  }
  func.func @transform_3(%arg0: i32) -> (i32, i32, i32) {
    %c0_i32 = arith.constant 0 : i32
    %c0_i32_0 = arith.constant 0 : i32
    %c0_i32_1 = arith.constant 0 : i32
    return %arg0, %c0_i32, %c0_i32_0 : i32, i32, i32
  }
  func.func @transform_4(%arg0: i32) -> (i32, i32) {
    %c0_i32 = arith.constant 0 : i32
    %c0_i32_0 = arith.constant 0 : i32
    %c0_i32_1 = arith.constant 0 : i32
    return %c0_i32, %c0_i32_0 : i32, i32
  }
}

</mosaic_0001>

<llo_original>
// kernel: tpu_custom_call.1
$region0: #{tpu_custom_call.1}
  #allocation0 [shape = 'u32[]', space=smem, size = 0x4, offset = 0x4, fixed_abs, tag = 'smem constant byte address 0x4 - core index']
  #allocation1 [shape = 'u32[144,128]{1,0:T(1,128)}', space=vmem, size = 0x12000, scoped, tag = 'internal scratch']
  %s0 = inlined_call_operand.hbm [shape: bf16[4,64,64], index: 0, kind: input, shape index: {}]
  %s1 = inlined_call_operand.hbm [shape: f32[64,128], index: 1, kind: input, shape index: {}]
  %s2 = inlined_call_operand.hbm [shape: f32[4,128,128], index: 2, kind: input, shape index: {}]
  %s3 = inlined_call_operand.vmem [shape: f32[4,1,128], index: 3, kind: input, shape index: {}]
  %s4 = inlined_call_operand.hbm [shape: f32[64,128], index: 4, kind: output, shape index: {}]
  %s5 = sld [smem:[#allocation0]]
  $region73: #{tpu_custom_call.1} parent=0
    _
  %s7 = ssub.s32 1, %s5
  %s8 = scalar_select 0, %s7, %s5
  $region1: #{tpu_custom_call.1} parent=0
    #allocation2 [shape = 'u8[32768]{0}', space=vmem, size = 0x8000, scoped, tag = 'input window, operand 0']
    #allocation3 [shape = 's32[2]{0}', space=sflag, size = 0x8, scoped, tag = 'scoped memory for tpu_custom_call.1']
    #allocation4 [shape = 's32[2]{0}', space=sflag, size = 0x8, scoped, tag = 'scoped memory for tpu_custom_call.1']
    #allocation5 [shape = 'u8[32768]{0}', space=vmem, size = 0x8000, scoped, tag = 'input window, operand 1, single buffered']
    #allocation6 [shape = 's32[1]{0}', space=sflag, size = 0x4, scoped, tag = 'scoped memory for tpu_custom_call.1']
    #allocation7 [shape = 'u8[131072]{0}', space=vmem, size = 0x20000, scoped, tag = 'input window, operand 2']
    #allocation8 [shape = 'u8[32768]{0}', space=vmem, size = 0x8000, scoped, tag = 'output window, operand 0, single buffered']
    %9 = vsyncpa [#allocation3], 0
    %s10 = scalar_lea.sflag [#allocation3], 1
    %11 = vsyncpa %s10, 0
    %12 = vsyncpa [#allocation6], 0
    %13 = vsyncpa [#allocation4], 0
    loop: start=0, step=1, limit=6
    $region2: #{tpu_custom_call.1} parent=1 // loop_pre_header
      _
    $region3: #{tpu_custom_call.1} parent=1 // loop_header
      %s15 = sphi 0, %s19
      %p16 = scmp.ge.s32.totalorder %s15, 6
      %s25 = sphi 0, %s27
      %s28 = sphi 0, %s25
      %s29 = sphi 0, %s28
      %s45 = sphi 0, %s29
      %s49 = sphi 0, %s49
      %s51 = sphi 0, %s49
      %s52 = sphi 0, %s51
      %s66 = sphi 0, %s52
      %s72 = sphi 0, %s74
      %s75 = sphi 0, %s72
      %s76 = sphi 0, %s75
      %s92 = sphi 0, %s76
      %s98 = sphi 0, %s100
      %s101 = sphi 0, %s98
      %s102 = sphi 0, %s101
      %s118 = sphi 0, %s102
      %s122 = sphi 0, %s122
      %s124 = sphi 0, %s122
      %s125 = sphi 0, %s124
      %s139 = sphi 0, %s125
    $region4: #{tpu_custom_call.1} parent=1 // loop_header_branch
      %18 = sbr.rel (%p16) target = $region8
    $region5: #{tpu_custom_call.1} parent=1 // loop_body
      %s20 = ssub.s32 %s15, 1
      %s21 = ssub.s32 %s15, 2
      %s22 = sadd.s32 %s15, 1
      %s23 = ssub.s32 %s15, %s22
      %p24 = scmp.eq.s32.totalorder %s23, 0
      %s26 = sadd.s32 %s25, 1
      %s27 = scalar_select %p24, %s25, %s26
      %p30 = pneg %p24
      %p31 = scmp.eq.s32.totalorder %s15, 3
      %p32 = por %p30, %p31
      %p33 = scmp.ne.s32.totalorder %s25, %s28
      %p34 = scmp.eq.s32.totalorder %s15, 0
      %p35 = por %p33, %p34
      %p36 = scmp.ne.s32.totalorder %s25, %s28
      %p37 = scmp.eq.s32.totalorder %s20, 3
      %p38 = por %p36, %p37
      %p39 = scmp.ne.s32.totalorder %s28, %s29
      %p40 = scmp.eq.s32.totalorder %s20, 0
      %p41 = por %p39, %p40
      %p42 = scmp.ne.s32.totalorder %s28, %s29
      %p43 = scmp.eq.s32.totalorder %s21, 3
      %p44 = por %p42, %p43
      %p46 = scmp.ne.s32.totalorder %s29, %s45
      %p47 = scmp.eq.s32.totalorder %s21, 0
      %p48 = por %p46, %p47
      %s50 = sadd.s32 %s49, 1
      %p53 = scmp.eq.s32.totalorder %s15, 3
      %p54 = scmp.ne.s32.totalorder %s49, %s51
      %p55 = scmp.eq.s32.totalorder %s15, 0
      %p56 = por %p54, %p55
      %p57 = scmp.ne.s32.totalorder %s49, %s51
      %p58 = scmp.eq.s32.totalorder %s20, 3
      %p59 = por %p57, %p58
      %p60 = scmp.ne.s32.totalorder %s51, %s52
      %p61 = scmp.eq.s32.totalorder %s20, 0
      %p62 = por %p60, %p61
      %p63 = scmp.ne.s32.totalorder %s51, %s52
      %p64 = scmp.eq.s32.totalorder %s21, 3
      %p65 = por %p63, %p64
      %p67 = scmp.ne.s32.totalorder %s52, %s66
      %p68 = scmp.eq.s32.totalorder %s21, 0
      %p69 = por %p67, %p68
      %s70 = ssub.s32 %s15, %s22
      %p71 = scmp.eq.s32.totalorder %s70, 0
      %s73 = sadd.s32 %s72, 1
      %s74 = scalar_select %p71, %s72, %s73
      %p77 = pneg %p71
      %p78 = scmp.eq.s32.totalorder %s15, 3
      %p79 = por %p77, %p78
      %p80 = scmp.ne.s32.totalorder %s72, %s75
      %p81 = scmp.eq.s32.totalorder %s15, 0
      %p82 = por %p80, %p81
      %p83 = scmp.ne.s32.totalorder %s72, %s75
      %p84 = scmp.eq.s32.totalorder %s20, 3
      %p85 = por %p83, %p84
      %p86 = scmp.ne.s32.totalorder %s75, %s76
      %p87 = scmp.eq.s32.totalorder %s20, 0
      %p88 = por %p86, %p87
      %p89 = scmp.ne.s32.totalorder %s75, %s76
      %p90 = scmp.eq.s32.totalorder %s21, 3
      %p91 = por %p89, %p90
      %p93 = scmp.ne.s32.totalorder %s76, %s92
      %p94 = scmp.eq.s32.totalorder %s21, 0
      %p95 = por %p93, %p94
      %s96 = ssub.s32 %s15, %s22
      %p97 = scmp.eq.s32.totalorder %s96, 0
      %s99 = sadd.s32 %s98, 1
      %s100 = scalar_select %p97, %s98, %s99
      %p103 = pneg %p97
      %p104 = scmp.eq.s32.totalorder %s15, 3
      %p105 = por %p103, %p104
      %p106 = scmp.ne.s32.totalorder %s98, %s101
      %p107 = scmp.eq.s32.totalorder %s15, 0
      %p108 = por %p106, %p107
      %p109 = scmp.ne.s32.totalorder %s98, %s101
      %p110 = scmp.eq.s32.totalorder %s20, 3
      %p111 = por %p109, %p110
      %p112 = scmp.ne.s32.totalorder %s101, %s102
      %p113 = scmp.eq.s32.totalorder %s20, 0
      %p114 = por %p112, %p113
      %p115 = scmp.ne.s32.totalorder %s101, %s102
      %p116 = scmp.eq.s32.totalorder %s21, 3
      %p117 = por %p115, %p116
      %p119 = scmp.ne.s32.totalorder %s102, %s118
      %p120 = scmp.eq.s32.totalorder %s21, 0
      %p121 = por %p119, %p120
      %s123 = sadd.s32 %s122, 1
      %p126 = scmp.eq.s32.totalorder %s15, 3
      %p127 = scmp.ne.s32.totalorder %s122, %s124
      %p128 = scmp.eq.s32.totalorder %s15, 0
      %p129 = por %p127, %p128
      %p130 = scmp.ne.s32.totalorder %s122, %s124
      %p131 = scmp.eq.s32.totalorder %s20, 3
      %p132 = por %p130, %p131
      %p133 = scmp.ne.s32.totalorder %s124, %s125
      %p134 = scmp.eq.s32.totalorder %s20, 0
      %p135 = por %p133, %p134
      %p136 = scmp.ne.s32.totalorder %s124, %s125
      %p137 = scmp.eq.s32.totalorder %s21, 3
      %p138 = por %p136, %p137
      %p140 = scmp.ne.s32.totalorder %s125, %s139
      %p141 = scmp.eq.s32.totalorder %s21, 0
      %p142 = por %p140, %p141
      %p143 = scmp.le.s32.totalorder 1, %s15
      %p144 = scmp.lt.s32.totalorder %s15, 5
      %p145 = pnand %p143, %p144
      %p146 = pneg %p145
      // Predicated region
      $region9: #{tpu_custom_call.1} parent=5 // pred_check
        _
      $region10: #{tpu_custom_call.1} parent=5 // pred_check_branch
        %148 = sbr.rel (%p145) target = $region12
      $region11: #{tpu_custom_call.1} parent=5 // pred_region
        %s149 = ssub.s32 %s15, 1
        // Predicated region
        $region13: #{tpu_custom_call.1} parent=11 // pred_check
          %p150 = pneg %p62
        $region14: #{tpu_custom_call.1} parent=11 // pred_check_branch
          %152 = sbr.rel (%p150) target = $region16
        $region15: #{tpu_custom_call.1} parent=11 // pred_region
          %s154 = ssub.s32 1024, 1024
          %155 = vsyncadd [#allocation6], %s154
          %s156 = sshll.u32 [#allocation5], 4
          %s157 = int_to_ptr.vmem [resolvable:$true] %s156
          %162 = dma.hbm_to_vmem [thread:$0]  %s1, 1024, %s157, [#allocation6], 128, 128, 8
        $region16: #{tpu_custom_call.1} parent=11 // pred_fallthru
          _
      $region12: #{tpu_custom_call.1} parent=5 // pred_fallthru
        _
      %p163 = scmp.lt.s32.totalorder %s15, 4
      // Predicated region
      $region17: #{tpu_custom_call.1} parent=5 // pred_check
        %p164 = pneg %p163
      $region18: #{tpu_custom_call.1} parent=5 // pred_check_branch
        %166 = sbr.rel (%p164) target = $region20
      $region19: #{tpu_custom_call.1} parent=5 // pred_region
        // Predicated region
        $region21: #{tpu_custom_call.1} parent=19 // pred_check
          %p167 = pneg %p35
        $region22: #{tpu_custom_call.1} parent=19 // pred_check_branch
          %169 = sbr.rel (%p167) target = $region24
        $region23: #{tpu_custom_call.1} parent=19 // pred_region
          %s170 = sand.u32 %s15, 1
          %s171 = scalar_lea.sflag [#allocation3], %s170
          %s172 = sand.u32 %s25, 1
          %s173 = smul.addr %s172, 32
          %s174 = scalar_lea.vmem [#allocation2], %s173
          %s176 = ssub.s32 512, 512
          %177 = vsyncadd %s171, %s176
          %s178 = smul.addr %s15, 8
          %s179 = smul.addr %s178, 64
          %s180 = scalar_lea.hbm %s0, %s179
          %s181 = sshll.u32 %s174, 4
          %s182 = int_to_ptr.vmem [resolvable:$true] %s181
          %187 = dma.hbm_to_vmem [thread:$0]  %s180, 512, %s182, %s171, 64, 64, 4
        $region24: #{tpu_custom_call.1} parent=19 // pred_fallthru
          _
        // Predicated region
        $region25: #{tpu_custom_call.1} parent=19 // pred_check
          %p188 = pneg %p82
        $region26: #{tpu_custom_call.1} parent=19 // pred_check_branch
          %190 = sbr.rel (%p188) target = $region28
        $region27: #{tpu_custom_call.1} parent=19 // pred_region
          %s191 = sand.u32 %s15, 1
          %s192 = scalar_lea.sflag [#allocation3], %s191
          %s193 = sand.u32 %s72, 1
          %s194 = smul.addr %s193, 128
          %s195 = scalar_lea.vmem [#allocation7], %s194
          %s197 = ssub.s32 2048, 2048
          %198 = vsyncadd %s192, %s197
          %s199 = smul.addr %s15, 16
          %s200 = smul.addr %s199, 128
          %s201 = scalar_lea.hbm %s2, %s200
          %s202 = sshll.u32 %s195, 4
          %s203 = int_to_ptr.vmem [resolvable:$true] %s202
          %208 = dma.hbm_to_vmem [thread:$0]  %s201, 2048, %s203, %s192, 128, 128, 8
        $region28: #{tpu_custom_call.1} parent=19 // pred_fallthru
          _
        // Predicated region
        $region29: #{tpu_custom_call.1} parent=19 // pred_check
          %p209 = pneg %p108
        $region30: #{tpu_custom_call.1} parent=19 // pred_check_branch
          %211 = sbr.rel (%p209) target = $region32
        $region31: #{tpu_custom_call.1} parent=19 // pred_region
          %p212 = scmp.lt.s32.totalorder %s15, 3
          %s213 = scalar_select %p212, %s15, 3
          %s214 = scalar_lea.vmem %s3, %s213
        $region32: #{tpu_custom_call.1} parent=19 // pred_fallthru
          _
      $region20: #{tpu_custom_call.1} parent=5 // pred_fallthru
        _
      %p215 = scmp.le.s32.totalorder 1, %s15
      %p216 = scmp.lt.s32.totalorder %s15, 5
      %p217 = pnand %p215, %p216
      %p218 = pneg %p217
      // Predicated region
      $region33: #{tpu_custom_call.1} parent=5 // pred_check
        _
      $region34: #{tpu_custom_call.1} parent=5 // pred_check_branch
        %220 = sbr.rel (%p217) target = $region36
      $region35: #{tpu_custom_call.1} parent=5 // pred_region
        %s221 = ssub.s32 %s15, 1
        %s222 = sand.u32 %s20, 1
        %s223 = scalar_lea.sflag [#allocation3], %s222
        %s224 = sand.u32 %s28, 1
        %s225 = smul.addr %s224, 32
        %s226 = scalar_lea.vmem [#allocation2], %s225
        // Predicated region
        $region37: #{tpu_custom_call.1} parent=35 // pred_check
          %p227 = pneg %p41
        $region38: #{tpu_custom_call.1} parent=35 // pred_check_branch
          %229 = sbr.rel (%p227) target = $region40
        $region39: #{tpu_custom_call.1} parent=35 // pred_region
          %230 = dma.done %s223, 512
        $region40: #{tpu_custom_call.1} parent=35 // pred_fallthru
          _
        // Predicated region
        $region41: #{tpu_custom_call.1} parent=35 // pred_check
          %p231 = pneg %p62
        $region42: #{tpu_custom_call.1} parent=35 // pred_check_branch
          %233 = sbr.rel (%p231) target = $region44
        $region43: #{tpu_custom_call.1} parent=35 // pred_region
          %234 = dma.done [#allocation6], 1024
        $region44: #{tpu_custom_call.1} parent=35 // pred_fallthru
          _
        %s235 = sand.u32 %s20, 1
        %s236 = scalar_lea.sflag [#allocation3], %s235
        %s237 = sand.u32 %s75, 1
        %s238 = smul.addr %s237, 128
        %s239 = scalar_lea.vmem [#allocation7], %s238
        // Predicated region
        $region45: #{tpu_custom_call.1} parent=35 // pred_check
          %p240 = pneg %p88
        $region46: #{tpu_custom_call.1} parent=35 // pred_check_branch
          %242 = sbr.rel (%p240) target = $region48
        $region47: #{tpu_custom_call.1} parent=35 // pred_region
          %243 = dma.done %s236, 2048
        $region48: #{tpu_custom_call.1} parent=35 // pred_fallthru
          _
        %s244 = sand.u32 %s20, 1
        %s245 = scalar_lea.sflag [#allocation3], %s244
        %s246 = sand.u32 %s28, 1
        %s247 = smul.addr %s246, 32
        %s248 = scalar_lea.vmem [#allocation2], %s247
        %p249 = pneg %p41
        %p250 = pneg %p38
        %p251 = pneg %p62
        %p252 = pneg %p59
        %s253 = sand.u32 %s20, 1
        %s254 = scalar_lea.sflag [#allocation3], %s253
        %s255 = sand.u32 %s75, 1
        %s256 = smul.addr %s255, 128
        %s257 = scalar_lea.vmem [#allocation7], %s256
        %p258 = pneg %p88
        %p259 = pneg %p85
        %p260 = scmp.lt.s32.totalorder %s20, 3
        %s261 = scalar_select %p260, %s20, 3
        %s262 = scalar_lea.vmem %s3, %s261
        %p263 = pneg %p114
        %p264 = pneg %p111
        %p265 = pneg %p135
        %p266 = pneg %p132
        %p267 = scmp.lt.s32.totalorder %s20, 3
        %s268 = scalar_select %p267, %s20, 3
        %s269 = scalar_lea.vmem %s3, %s268
        %p271 = scmp.eq.s32.totalorder %s20, 0
        // Predicated region
        $region49: #{tpu_custom_call.1} parent=35 // pred_check
          %p272 = pneg %p271
        $region50: #{tpu_custom_call.1} parent=35 // pred_check_branch
          %274 = sbr.rel (%p272) target = $region52
        $region51: #{tpu_custom_call.1} parent=35 // pred_region
          %v275 = vld [vmem:[#allocation5] sm:$0xff]
          %v276 = vld [vmem:[#allocation5 + $0x8] sm:$0xff]
          %v277 = vld [vmem:[#allocation5 + $0x10] sm:$0xff]
          %v278 = vld [vmem:[#allocation5 + $0x18] sm:$0xff]
          %v279 = vld [vmem:[#allocation5 + $0x20] sm:$0xff]
          %v280 = vld [vmem:[#allocation5 + $0x28] sm:$0xff]
          %v281 = vld [vmem:[#allocation5 + $0x30] sm:$0xff]
          %v282 = vld [vmem:[#allocation5 + $0x38] sm:$0xff]
          %283 = vst [vmem:[#allocation8] sm:$0xff] %v275
          %284 = vst [vmem:[#allocation8 + $0x8] sm:$0xff] %v276
          %285 = vst [vmem:[#allocation8 + $0x10] sm:$0xff] %v277
          %286 = vst [vmem:[#allocation8 + $0x18] sm:$0xff] %v278
          %287 = vst [vmem:[#allocation8 + $0x20] sm:$0xff] %v279
          %288 = vst [vmem:[#allocation8 + $0x28] sm:$0xff] %v280
          %289 = vst [vmem:[#allocation8 + $0x30] sm:$0xff] %v281
          %290 = vst [vmem:[#allocation8 + $0x38] sm:$0xff] %v282
        $region52: #{tpu_custom_call.1} parent=35 // pred_fallthru
          _
        %v291 = vld [vmem:[#allocation8] sm:$0xff]
        %v292 = vld [vmem:[#allocation8 + $0x8] sm:$0xff]
        %v293 = vld [vmem:[#allocation8 + $0x10] sm:$0xff]
        %v294 = vld [vmem:[#allocation8 + $0x18] sm:$0xff]
        %v295 = vld [vmem:[#allocation8 + $0x20] sm:$0xff]
        %v296 = vld [vmem:[#allocation8 + $0x28] sm:$0xff]
        %v297 = vld [vmem:[#allocation8 + $0x30] sm:$0xff]
        %v298 = vld [vmem:[#allocation8 + $0x38] sm:$0xff]
        %v299 = vld [vmem:[%s226] sm:$0xf]
        %v300 = vld [vmem:[%s226 + $0x4] sm:$0xf]
        %v301 = vld [vmem:[%s226 + $0x8] sm:$0xf]
        %v302 = vld [vmem:[%s226 + $0xc] sm:$0xf]
        %v303 = vld [vmem:[%s226 + $0x10] sm:$0xf]
        %v304 = vld [vmem:[%s226 + $0x14] sm:$0xf]
        %v305 = vld [vmem:[%s226 + $0x18] sm:$0xf]
        %v306 = vld [vmem:[%s226 + $0x1c] sm:$0xf]
        %v307 = vpack.c.bf16 %v292, %v291
        %v308 = vpack.c.bf16 %v294, %v293
        %v309 = vpack.c.bf16 %v296, %v295
        %v310 = vpack.c.bf16 %v298, %v297
        %v319 = vunpack.c.l.b16 %v299
        %v320 = vunpack.c.l.b16 %v300
        %v321 = vunpack.c.l.b16 %v301
        %v322 = vunpack.c.l.b16 %v302
        %v323 = vunpack.c.l.b16 %v303
        %v324 = vunpack.c.l.b16 %v304
        %v325 = vunpack.c.l.b16 %v305
        %v326 = vunpack.c.l.b16 %v306
        %v327 = vpack.c.b16 %v320, %v319
        %v328 = vpack.c.b16 %v322, %v321
        %v329 = vpack.c.b16 %v324, %v323
        %v330 = vpack.c.b16 %v326, %v325
        %vm331 = vcmask 523264
        %v333 = vsel %vm331, %v327, 0
        %v336 = vsel %vm331, %v328, 0
        %v339 = vsel %vm331, %v329, 0
        %v342 = vsel %vm331, %v330, 0
        %344 = vmatprep.subr.bf16.mxu0 0
        %345 = vmatpush1.bf16.msra.mxu0 %v307
        %346 = vmatprep.subr.bf16.mxu0 0
        %347 = vmatpush1.bf16.msra.mxu0 %v308
        %348 = vmatprep.subr.bf16.mxu0 0
        %349 = vmatpush1.bf16.msra.mxu0 %v309
        %350 = vmatprep.subr.bf16.mxu0 0
        %351 = vmatpush1.bf16.msra.mxu0 %v310
        %352 = vmatprep.subr.bf16.mxu0 0
        %353 = vmatpush1.bf16.msra.mxu0 0
        %354 = vmatprep.subr.bf16.mxu0 0
        %355 = vmatpush1.bf16.msra.mxu0 0
        %356 = vmatprep.subr.bf16.mxu0 0
        %357 = vmatpush1.bf16.msra.mxu0 0
        %358 = vmatprep.subr.bf16.mxu0 0
        %359 = vmatpush1.bf16.msra.mxu0 0
        %360 = vmatprep.subr.bf16.mxu0 0
        %361 = vmatpush1.bf16.msra.mxu0 0
        %362 = vmatprep.subr.bf16.mxu0 0
        %363 = vmatpush1.bf16.msra.mxu0 0
        %364 = vmatprep.subr.bf16.mxu0 0
        %365 = vmatpush1.bf16.msra.mxu0 0
        %366 = vmatprep.subr.bf16.mxu0 0
        %367 = vmatpush1.bf16.msra.mxu0 0
        %368 = vmatprep.subr.bf16.mxu0 0
        %369 = vmatpush1.bf16.msra.mxu0 0
        %370 = vmatprep.subr.bf16.mxu0 0
        %371 = vmatpush1.bf16.msra.mxu0 0
        %372 = vmatprep.subr.bf16.mxu0 0
        %373 = vmatpush1.bf16.msra.mxu0 0
        %374 = vmatprep.subr.bf16.mxu0 0
        %375 = vmatpush1.bf16.msra.mxu0 0
        %376 = vmatprep.mubr.bf16.mxu0 0
        %377 = vmatmul.mubr.bf16.gmra.mrb[0].mxu0 %v333
        %v378 = vpop.f32.mrb[0].mxu0
        %v379 = vadd.f32 0.0, %v378
        %v380 = vpop.f32.mrb[0].mxu0
        %v381 = vpop.f32.mrb[0].mxu0
        %v382 = vadd.f32 0.0, %v381
        %v383 = vpop.f32.mrb[0].mxu0
        %384 = vmatprep.mubr.bf16.mxu0 0
        %385 = vmatmul.mubr.bf16.gmra.mrb[0].mxu0 %v336
        %v386 = vpop.f32.mrb[0].mxu0
        %v387 = vadd.f32 0.0, %v386
        %v388 = vpop.f32.mrb[0].mxu0
        %v389 = vpop.f32.mrb[0].mxu0
        %v390 = vadd.f32 0.0, %v389
        %v391 = vpop.f32.mrb[0].mxu0
        %392 = vmatprep.mubr.bf16.mxu0 0
        %393 = vmatmul.mubr.bf16.gmra.mrb[0].mxu0 %v339
        %v394 = vpop.f32.mrb[0].mxu0
        %v395 = vadd.f32 0.0, %v394
        %v396 = vpop.f32.mrb[0].mxu0
        %v397 = vpop.f32.mrb[0].mxu0
        %v398 = vadd.f32 0.0, %v397
        %v399 = vpop.f32.mrb[0].mxu0
        %400 = vmatprep.mubr.bf16.mxu0 0
        %401 = vmatmul.mubr.bf16.gmra.mrb[0].mxu0 %v342
        %v402 = vpop.f32.mrb[0].mxu0
        %v403 = vadd.f32 0.0, %v402
        %v404 = vpop.f32.mrb[0].mxu0
        %v405 = vpop.f32.mrb[0].mxu0
        %v406 = vadd.f32 0.0, %v405
        %v407 = vpop.f32.mrb[0].mxu0
        %408 = vdwg.mxu0
        %v409 = vld [vmem:[%s239] sm:$0xff]
        %v410 = vld [vmem:[%s239 + $0x8] sm:$0xff]
        %v411 = vld [vmem:[%s239 + $0x10] sm:$0xff]
        %v412 = vld [vmem:[%s239 + $0x18] sm:$0xff]
        %v413 = vld [vmem:[%s239 + $0x20] sm:$0xff]
        %v414 = vld [vmem:[%s239 + $0x28] sm:$0xff]
        %v415 = vld [vmem:[%s239 + $0x30] sm:$0xff]
        %v416 = vld [vmem:[%s239 + $0x38] sm:$0xff]
        %v417 = vld [vmem:[%s239 + $0x40] sm:$0xff]
        %v418 = vld [vmem:[%s239 + $0x48] sm:$0xff]
        %v419 = vld [vmem:[%s239 + $0x50] sm:$0xff]
        %v420 = vld [vmem:[%s239 + $0x58] sm:$0xff]
        %v421 = vld [vmem:[%s239 + $0x60] sm:$0xff]
        %v422 = vld [vmem:[%s239 + $0x68] sm:$0xff]
        %v423 = vld [vmem:[%s239 + $0x70] sm:$0xff]
        %v424 = vld [vmem:[%s239 + $0x78] sm:$0xff]
        %v425 = vld [vmem:[%s269] sm:$0x1]
        %v427 = vlaneseq
        %v428 = vshrl.u32 %v427, 7
        %v429 = vsub.s32 0, %v428
        %v430 = vrot.slane %v425, %v429
        %432 = vmatprep.subr.mxu0 0.0
        %433 = vmatpush1.msra.mxu0 %v409
        %434 = vmatprep.subr.mxu0 0.0
        %435 = vmatpush1.msra.mxu0 %v410
        %436 = vmatprep.subr.mxu0 0.0
        %437 = vmatpush1.msra.mxu0 %v411
        %438 = vmatprep.subr.mxu0 0.0
        %439 = vmatpush1.msra.mxu0 %v412
        %440 = vmatprep.subr.mxu0 0.0
        %441 = vmatpush1.msra.mxu0 %v413
        %442 = vmatprep.subr.mxu0 0.0
        %443 = vmatpush1.msra.mxu0 %v414
        %444 = vmatprep.subr.mxu0 0.0
        %445 = vmatpush1.msra.mxu0 %v415
        %446 = vmatprep.subr.mxu0 0.0
        %447 = vmatpush1.msra.mxu0 %v416
        %448 = vmatprep.subr.mxu0 0.0
        %449 = vmatpush1.msra.mxu0 %v417
        %450 = vmatprep.subr.mxu0 0.0
        %451 = vmatpush1.msra.mxu0 %v418
        %452 = vmatprep.subr.mxu0 0.0
        %453 = vmatpush1.msra.mxu0 %v419
        %454 = vmatprep.subr.mxu0 0.0
        %455 = vmatpush1.msra.mxu0 %v420
        %456 = vmatprep.subr.mxu0 0.0
        %457 = vmatpush1.msra.mxu0 %v421
        %458 = vmatprep.subr.mxu0 0.0
        %459 = vmatpush1.msra.mxu0 %v422
        %460 = vmatprep.subr.mxu0 0.0
        %461 = vmatpush1.msra.mxu0 %v423
        %462 = vmatprep.subr.mxu0 0.0
        %463 = vmatpush1.msra.mxu0 %v424
        %464 = vmatprep.subr.mxu0 0.0
        %465 = vmatpush1.msra.mxu0 0.0
        %466 = vmatprep.subr.mxu0 0.0
        %467 = vmatpush1.msra.mxu0 0.0
        %468 = vmatprep.subr.mxu0 0.0
        %469 = vmatpush1.msra.mxu0 0.0
        %470 = vmatprep.subr.mxu0 0.0
        %471 = vmatpush1.msra.mxu0 0.0
        %472 = vmatprep.subr.mxu0 0.0
        %473 = vmatpush1.msra.mxu0 0.0
        %474 = vmatprep.subr.mxu0 0.0
        %475 = vmatpush1.msra.mxu0 0.0
        %476 = vmatprep.subr.mxu0 0.0
        %477 = vmatpush1.msra.mxu0 0.0
        %478 = vmatprep.subr.mxu0 0.0
        %479 = vmatpush1.msra.mxu0 0.0
        %480 = vmatprep.subr.mxu0 0.0
        %481 = vmatpush1.msra.mxu0 0.0
        %482 = vmatprep.subr.mxu0 0.0
        %483 = vmatpush1.msra.mxu0 0.0
        %484 = vmatprep.subr.mxu0 0.0
        %485 = vmatpush1.msra.mxu0 0.0
        %486 = vmatprep.subr.mxu0 0.0
        %487 = vmatpush1.msra.mxu0 0.0
        %488 = vmatprep.subr.mxu0 0.0
        %489 = vmatpush1.msra.mxu0 0.0
        %490 = vmatprep.subr.mxu0 0.0
        %491 = vmatpush1.msra.mxu0 0.0
        %492 = vmatprep.subr.mxu0 0.0
        %493 = vmatpush1.msra.mxu0 0.0
        %494 = vmatprep.subr.mxu0 0.0
        %495 = vmatpush1.msra.mxu0 0.0
        %496 = vmatprep.mubr.f32.mxu0 0.0
        %497 = vmatmul.mubr.f32.gmra.mrb[0].mxu0 %v379
        %v498 = vpop.f32.mrb[0].mxu0
        %v499 = vadd.f32 %v430, %v498
        %v500 = vpop.f32.mrb[0].mxu0
        %501 = vmatprep.mubr.f32.mxu0 0.0
        %502 = vmatmul.mubr.f32.gmra.mrb[0].mxu0 %v382
        %v503 = vpop.f32.mrb[0].mxu0
        %v504 = vadd.f32 %v430, %v503
        %v505 = vpop.f32.mrb[0].mxu0
        %506 = vmatprep.mubr.f32.mxu0 0.0
        %507 = vmatmul.mubr.f32.gmra.mrb[0].mxu0 %v387
        %v508 = vpop.f32.mrb[0].mxu0
        %v509 = vadd.f32 %v430, %v508
        %v510 = vpop.f32.mrb[0].mxu0
        %511 = vmatprep.mubr.f32.mxu0 0.0
        %512 = vmatmul.mubr.f32.gmra.mrb[0].mxu0 %v390
        %v513 = vpop.f32.mrb[0].mxu0
        %v514 = vadd.f32 %v430, %v513
        %v515 = vpop.f32.mrb[0].mxu0
        %516 = vmatprep.mubr.f32.mxu0 0.0
        %517 = vmatmul.mubr.f32.gmra.mrb[0].mxu0 %v395
        %v518 = vpop.f32.mrb[0].mxu0
        %v519 = vadd.f32 %v430, %v518
        %v520 = vpop.f32.mrb[0].mxu0
        %521 = vmatprep.mubr.f32.mxu0 0.0
        %522 = vmatmul.mubr.f32.gmra.mrb[0].mxu0 %v398
        %v523 = vpop.f32.mrb[0].mxu0
        %v524 = vadd.f32 %v430, %v523
        %v525 = vpop.f32.mrb[0].mxu0
        %526 = vmatprep.mubr.f32.mxu0 0.0
        %527 = vmatmul.mubr.f32.gmra.mrb[0].mxu0 %v403
        %v528 = vpop.f32.mrb[0].mxu0
        %v529 = vadd.f32 %v430, %v528
        %v530 = vpop.f32.mrb[0].mxu0
        %531 = vmatprep.mubr.f32.mxu0 0.0
        %532 = vmatmul.mubr.f32.gmra.mrb[0].mxu0 %v406
        %v533 = vpop.f32.mrb[0].mxu0
        %v534 = vadd.f32 %v430, %v533
        %v535 = vpop.f32.mrb[0].mxu0
        %536 = vdwg.mxu0
        %p537 = scmp.lt.s32.totalorder %s20, 3
        // Predicated region
        $region53: #{tpu_custom_call.1} parent=35 // pred_check
          %p538 = pneg %p537
        $region54: #{tpu_custom_call.1} parent=35 // pred_check_branch
          %540 = sbr.rel (%p538) target = $region56
        $region55: #{tpu_custom_call.1} parent=35 // pred_region
          %v541 = vmul.f32 %v499, 0.5
          %v542 = vmul.f32 %v504, 0.5
          %v543 = vmul.f32 %v509, 0.5
          %v544 = vmul.f32 %v514, 0.5
          %v545 = vmul.f32 %v519, 0.5
          %v546 = vmul.f32 %v524, 0.5
          %v547 = vmul.f32 %v529, 0.5
          %v548 = vmul.f32 %v534, 0.5
          %v549 = vmul.f32 %v499, 0.044715
          %v550 = vmul.f32 %v504, 0.044715
          %v551 = vmul.f32 %v509, 0.044715
          %v552 = vmul.f32 %v514, 0.044715
          %v553 = vmul.f32 %v519, 0.044715
          %v554 = vmul.f32 %v524, 0.044715
          %v555 = vmul.f32 %v529, 0.044715
          %v556 = vmul.f32 %v534, 0.044715
          %v557 = vmul.f32 %v549, %v499
          %v558 = vmul.f32 %v550, %v504
          %v559 = vmul.f32 %v551, %v509
          %v560 = vmul.f32 %v552, %v514
          %v561 = vmul.f32 %v553, %v519
          %v562 = vmul.f32 %v554, %v524
          %v563 = vmul.f32 %v555, %v529
          %v564 = vmul.f32 %v556, %v534
          %v565 = vmul.f32 %v557, %v499
          %v566 = vmul.f32 %v558, %v504
          %v567 = vmul.f32 %v559, %v509
          %v568 = vmul.f32 %v560, %v514
          %v569 = vmul.f32 %v561, %v519
          %v570 = vmul.f32 %v562, %v524
          %v571 = vmul.f32 %v563, %v529
          %v572 = vmul.f32 %v564, %v534
          %v573 = vadd.f32 %v499, %v565
          %v574 = vadd.f32 %v504, %v566
          %v575 = vadd.f32 %v509, %v567
          %v576 = vadd.f32 %v514, %v568
          %v577 = vadd.f32 %v519, %v569
          %v578 = vadd.f32 %v524, %v570
          %v579 = vadd.f32 %v529, %v571
          %v580 = vadd.f32 %v534, %v572
          %v581 = vmul.f32 %v573, 0.7978846
          %v582 = vmul.f32 %v574, 0.7978846
          %v583 = vmul.f32 %v575, 0.7978846
          %v584 = vmul.f32 %v576, 0.7978846
          %v585 = vmul.f32 %v577, 0.7978846
          %v586 = vmul.f32 %v578, 0.7978846
          %v587 = vmul.f32 %v579, 0.7978846
          %v588 = vmul.f32 %v580, 0.7978846
          %v589 = vtanh.pop %v581
          %v590 = vtanh.pop %v582
          %v591 = vtanh.pop %v583
          %v592 = vtanh.pop %v584
          %v593 = vtanh.pop %v585
          %v594 = vtanh.pop %v586
          %v595 = vtanh.pop %v587
          %v596 = vtanh.pop %v588
          %v597 = vadd.f32 %v589, 1.0
          %v598 = vadd.f32 %v590, 1.0
          %v599 = vadd.f32 %v591, 1.0
          %v600 = vadd.f32 %v592, 1.0
          %v601 = vadd.f32 %v593, 1.0
          %v602 = vadd.f32 %v594, 1.0
          %v603 = vadd.f32 %v595, 1.0
          %v604 = vadd.f32 %v596, 1.0
          %v605 = vmul.f32 %v541, %v597
          %v606 = vmul.f32 %v542, %v598
          %v607 = vmul.f32 %v543, %v599
          %v608 = vmul.f32 %v544, %v600
          %v609 = vmul.f32 %v545, %v601
          %v610 = vmul.f32 %v546, %v602
          %v611 = vmul.f32 %v547, %v603
          %v612 = vmul.f32 %v548, %v604
          %613 = vst [vmem:[#allocation8] sm:$0xff] %v605
          %614 = vst [vmem:[#allocation8 + $0x8] sm:$0xff] %v606
          %615 = vst [vmem:[#allocation8 + $0x10] sm:$0xff] %v607
          %616 = vst [vmem:[#allocation8 + $0x18] sm:$0xff] %v608
          %617 = vst [vmem:[#allocation8 + $0x20] sm:$0xff] %v609
          %618 = vst [vmem:[#allocation8 + $0x28] sm:$0xff] %v610
          %619 = vst [vmem:[#allocation8 + $0x30] sm:$0xff] %v611
          %620 = vst [vmem:[#allocation8 + $0x38] sm:$0xff] %v612
        $region56: #{tpu_custom_call.1} parent=35 // pred_fallthru
          _
        %p621 = scmp.eq.s32.totalorder %s20, 3
        // Predicated region
        $region57: #{tpu_custom_call.1} parent=35 // pred_check
          %p622 = pneg %p621
        $region58: #{tpu_custom_call.1} parent=35 // pred_check_branch
          %624 = sbr.rel (%p622) target = $region60
        $region59: #{tpu_custom_call.1} parent=35 // pred_region
          %625 = vst [vmem:[#allocation8] sm:$0xff] %v499
          %626 = vst [vmem:[#allocation8 + $0x8] sm:$0xff] %v504
          %627 = vst [vmem:[#allocation8 + $0x10] sm:$0xff] %v509
          %628 = vst [vmem:[#allocation8 + $0x18] sm:$0xff] %v514
          %629 = vst [vmem:[#allocation8 + $0x20] sm:$0xff] %v519
          %630 = vst [vmem:[#allocation8 + $0x28] sm:$0xff] %v524
          %631 = vst [vmem:[#allocation8 + $0x30] sm:$0xff] %v529
          %632 = vst [vmem:[#allocation8 + $0x38] sm:$0xff] %v534
        $region60: #{tpu_custom_call.1} parent=35 // pred_fallthru
          _
        // Predicated region
        $region61: #{tpu_custom_call.1} parent=35 // pred_check
          %p633 = pneg %p132
        $region62: #{tpu_custom_call.1} parent=35 // pred_check_branch
          %635 = sbr.rel (%p633) target = $region64
        $region63: #{tpu_custom_call.1} parent=35 // pred_region
          %s637 = ssub.s32 1024, 1024
          %638 = vsyncadd [#allocation4], %s637
          %s639 = sshll.u32 [#allocation8], 4
          %s640 = int_to_ptr.vmem [resolvable:$true] %s639
          %645 = dma.vmem_to_hbm [thread:$0]  %s640, 1024, %s4, [#allocation4], 128, 128, 8
        $region64: #{tpu_custom_call.1} parent=35 // pred_fallthru
          _
        // Predicated region
        $region65: #{tpu_custom_call.1} parent=35 // pred_check
          %p646 = pneg %p132
        $region66: #{tpu_custom_call.1} parent=35 // pred_check_branch
          %648 = sbr.rel (%p646) target = $region68
        $region67: #{tpu_custom_call.1} parent=35 // pred_region
          %649 = dma.done [#allocation4], 1024
        $region68: #{tpu_custom_call.1} parent=35 // pred_fallthru
          _
      $region36: #{tpu_custom_call.1} parent=5 // pred_fallthru
        _
      %p650 = scmp.le.s32.totalorder 2, %s15
      // Predicated region
      $region69: #{tpu_custom_call.1} parent=5 // pred_check
        %p651 = pneg %p650
      $region70: #{tpu_custom_call.1} parent=5 // pred_check_branch
        %653 = sbr.rel (%p651) target = $region72
      $region71: #{tpu_custom_call.1} parent=5 // pred_region
        %s654 = ssub.s32 %s15, 2
      $region72: #{tpu_custom_call.1} parent=5 // pred_fallthru
        _
    $region6: #{tpu_custom_call.1} parent=1 // loop_footer
      %s19 = sadd.s32 1, %s15
    $region7: #{tpu_custom_call.1} parent=1 // loop_footer_branch
      %14 = sbr.rel target = $region3
    $region8: #{tpu_custom_call.1} parent=1 // loop_exit
      _
    %655 = vsyncpa [#allocation3], 1
    %s656 = scalar_lea.sflag [#allocation3], 1
    %657 = vsyncpa %s656, 1
    %658 = vsyncpa [#allocation6], 1
    %659 = vsyncpa [#allocation4], 1
    %s660 = scalar_lea.sflag [#allocation4], 1
    %661 = vsyncpa %s660, 1

</llo_original>
